<compile_context>
chip_gen: v5e
topology: v5e:2x2
jax: 0.10.0
libtpu: 0.0.40
codegen_flags: <defaults>
</compile_context>

<pallas_src>
import functools

import jax
import jax.numpy as jnp
from jax.experimental import pallas as pl
from jax.experimental.pallas import tpu as pltpu

HIDDEN = 512          # fixed by the module definition
TILE_B_MAX = 256      # batch tile; sized so double-buffered tiles + resident
                      # weights fit comfortably in v7x's 64 MiB VMEM.


def _round_up(x, m):
    return (x + m - 1) // m * m


def _demo_encoder_kernel(x_ref, w1_ref, b1_ref, w2_ref, b2_ref, o_ref):
    # First linear: bf16 MXU matmul, f32 accumulation.
    h = jnp.dot(x_ref[...], w1_ref[...], preferred_element_type=jnp.float32)
    # Bias + ReLU in f32 on the VPU (b1 is (1, HIDDEN), broadcasts over rows).
    h = jnp.maximum(h + b1_ref[...], 0.0)
    # Second linear: cast activation to bf16 only at the MXU input.
    y = jnp.dot(h.astype(w2_ref.dtype), w2_ref[...],
                preferred_element_type=jnp.float32)
    o_ref[...] = (y + b2_ref[...]).astype(o_ref.dtype)


@functools.partial(jax.jit, static_argnames=())
def demo_encoder(x, w1, b1, w2, b2):
    """x: (B, input_dim) f32; w1: (input_dim, 512); w2: (512, proj). Returns (B, proj) f32."""
    B, input_dim = x.shape
    proj_dim = w2.shape[1]

    # ---- lane-dense padding (multiples of 128 on contracting / output dims) ----
    Kp = _round_up(input_dim, 128)
    Np = _round_up(proj_dim, 128)
    tile_b = min(TILE_B_MAX, _round_up(B, 8))
    B_pad = _round_up(B, tile_b)

    x_p = jnp.zeros((B_pad, Kp), jnp.bfloat16).at[:B, :input_dim].set(
        x.astype(jnp.bfloat16))
    w1_p = jnp.zeros((Kp, HIDDEN), jnp.bfloat16).at[:input_dim, :].set(
        w1.astype(jnp.bfloat16))
    w2_p = jnp.zeros((HIDDEN, Np), jnp.bfloat16).at[:, :proj_dim].set(
        w2.astype(jnp.bfloat16))
    b1_p = b1.astype(jnp.float32).reshape(1, HIDDEN)
    b2_p = jnp.zeros((1, Np), jnp.float32).at[0, :proj_dim].set(
        b2.astype(jnp.float32))

    grid = (B_pad // tile_b,)

    # VMEM budget (double-buffered tiles + weights counted x2 for safety).
    vmem_needed = 2 * (tile_b * Kp * 2 + tile_b * Np * 4
                       + Kp * HIDDEN * 2 + HIDDEN * Np * 2
                       + HIDDEN * 4 + Np * 4)
    vmem_limit = min(100 * 2**20, max(32 * 2**20, int(vmem_needed * 1.5)))

    cost = pl.CostEstimate(
        flops=2 * B_pad * (Kp * HIDDEN + HIDDEN * Np),
        transcendentals=0,
        bytes_accessed=(x_p.size * 2 + w1_p.size * 2 + w2_p.size * 2
                        + b1_p.size * 4 + b2_p.size * 4 + B_pad * Np * 4),
    )

    # TODO(synk): for very large input_dim add a K grid axis with a f32 VMEM
    # accumulator (pl.when init/finalize) so W1 / x tiles stay bounded on v7x.
    out = pl.pallas_call(
        _demo_encoder_kernel,
        out_shape=jax.ShapeDtypeStruct((B_pad, Np), jnp.float32),
        grid_spec=pltpu.PrefetchScalarGridSpec(
            num_scalar_prefetch=0,
            grid=grid,
            in_specs=[
                pl.BlockSpec((tile_b, Kp), lambda i: (i, 0)),     # x tile
                pl.BlockSpec((Kp, HIDDEN), lambda i: (0, 0)),     # W1 (resident)
                pl.BlockSpec((1, HIDDEN), lambda i: (0, 0)),      # b1 (resident)
                pl.BlockSpec((HIDDEN, Np), lambda i: (0, 0)),     # W2 (resident)
                pl.BlockSpec((1, Np), lambda i: (0, 0)),          # b2 (resident)
            ],
            out_specs=pl.BlockSpec((tile_b, Np), lambda i: (i, 0)),
        ),
        compiler_params=pltpu.CompilerParams(
            dimension_semantics=("parallel",),
            vmem_limit_bytes=vmem_limit,
        ),
        cost_estimate=cost,
    )(x_p, w1_p, b1_p, w2_p, b2_p)

    return out[:B, :proj_dim]


def init_params(key, input_dim, projection_dim, dtype=jnp.float32):
    """Deterministic init mimicking PyTorch Linear default (U(-1/sqrt(fan_in), 1/sqrt(fan_in)))."""
    k1, k2, k3, k4 = jax.random.split(key, 4)
    lim1 = 1.0 / jnp.sqrt(jnp.float32(input_dim))
    lim2 = 1.0 / jnp.sqrt(jnp.float32(HIDDEN))
    w1 = jax.random.uniform(k1, (input_dim, HIDDEN), dtype, -lim1, lim1)
    b1 = jax.random.uniform(k2, (HIDDEN,), dtype, -lim1, lim1)
    w2 = jax.random.uniform(k3, (HIDDEN, projection_dim), dtype, -lim2, lim2)
    b2 = jax.random.uniform(k4, (projection_dim,), dtype, -lim2, lim2)
    return w1, b1, w2, b2


if __name__ == "__main__":
    key = jax.random.PRNGKey(0)
    kx, kp = jax.random.split(key)

    B, input_dim, projection_dim = 8, 32, 64
    x = jax.random.normal(kx, (B, input_dim), jnp.float32)
    w1, b1, w2, b2 = init_params(kp, input_dim, projection_dim)

    out = demo_encoder(x, w1, b1, w2, b2)
    jax.block_until_ready(out)

    # Reference check in plain JAX (f32); bf16 MXU inputs -> loosened tolerance.
    ref = jnp.maximum(x @ w1 + b1, 0.0) @ w2 + b2
    assert out.shape == (B, projection_dim)
    assert jnp.allclose(out, ref, atol=2e-2, rtol=2e-2), (
        float(jnp.max(jnp.abs(out - ref))))

    print("KERNEL_OK")
</pallas_src>

<mosaic_0001>
module attributes {stable_mosaic.version = 11 : i64} {
  func.func @_demo_encoder_kernel(%arg0: i32, %arg1: memref<8x128xbf16, #tpu.memory_space<vmem>>, %arg2: memref<128x512xbf16, #tpu.memory_space<vmem>>, %arg3: memref<1x512xf32, #tpu.memory_space<vmem>>, %arg4: memref<512x128xbf16, #tpu.memory_space<vmem>>, %arg5: memref<1x128xf32, #tpu.memory_space<vmem>>, %arg6: memref<8x128xf32, #tpu.memory_space<vmem>>) attributes {dimension_semantics = [#tpu.dimension_semantics<parallel>], iteration_bounds = array<i64: 1>, scalar_prefetch = 0 : i64, scratch_operands = 0 : i64, tpu.core_type = #tpu.core_type<tc>, window_params = [{transform_indices = @transform_0, window_bounds = array<i64: 8, 128>}, {pipeline_mode = #tpu.pipeline_mode<synchronous>, transform_indices = @transform_1, window_bounds = array<i64: 128, 512>}, {pipeline_mode = #tpu.pipeline_mode<synchronous>, transform_indices = @transform_2, window_bounds = array<i64: 1, 512>}, {pipeline_mode = #tpu.pipeline_mode<synchronous>, transform_indices = @transform_3, window_bounds = array<i64: 512, 128>}, {pipeline_mode = #tpu.pipeline_mode<synchronous>, transform_indices = @transform_4, window_bounds = array<i64: 1, 128>}, {transform_indices = @transform_5, window_bounds = array<i64: 8, 128>}]} {
    %c0 = arith.constant 0 : index
    %c0_0 = arith.constant 0 : index
    %0 = vector.load %arg1[%c0, %c0_0] : memref<8x128xbf16, #tpu.memory_space<vmem>>, vector<8x128xbf16>
    %c0_1 = arith.constant 0 : index
    %c0_2 = arith.constant 0 : index
    %1 = vector.load %arg2[%c0_1, %c0_2] : memref<128x512xbf16, #tpu.memory_space<vmem>>, vector<128x512xbf16>
    %cst = arith.constant dense<0.000000e+00> : vector<8x512xf32>
    %2 = tpu.matmul %0, %1, %cst {dimension_numbers = #tpu.dot_dimension_numbers<[1], [0], [0], [1], [0, 0, 1, 1], [], []>} : vector<8x128xbf16>, vector<128x512xbf16>, vector<8x512xf32> -> vector<8x512xf32>
    %c0_3 = arith.constant 0 : index
    %c0_4 = arith.constant 0 : index
    %3 = vector.load %arg3[%c0_3, %c0_4] : memref<1x512xf32, #tpu.memory_space<vmem>>, vector<1x512xf32>
    %4 = vector.broadcast %3 : vector<1x512xf32> to vector<8x512xf32>
    %5 = arith.addf %2, %4 : vector<8x512xf32>
    %cst_5 = arith.constant 0.000000e+00 : f32
    %6 = vector.broadcast %cst_5 : f32 to vector<8x512xf32>
    %7 = arith.maximumf %5, %6 : vector<8x512xf32>
    %8 = arith.truncf %7 : vector<8x512xf32> to vector<8x512xbf16>
    %c0_6 = arith.constant 0 : index
    %c0_7 = arith.constant 0 : index
    %9 = vector.load %arg4[%c0_6, %c0_7] : memref<512x128xbf16, #tpu.memory_space<vmem>>, vector<512x128xbf16>
    %cst_8 = arith.constant dense<0.000000e+00> : vector<8x128xf32>
    %10 = tpu.matmul %8, %9, %cst_8 {dimension_numbers = #tpu.dot_dimension_numbers<[1], [0], [0], [1], [0, 0, 1, 1], [], []>} : vector<8x512xbf16>, vector<512x128xbf16>, vector<8x128xf32> -> vector<8x128xf32>
    %c0_9 = arith.constant 0 : index
    %c0_10 = arith.constant 0 : index
    %11 = vector.load %arg5[%c0_9, %c0_10] : memref<1x128xf32, #tpu.memory_space<vmem>>, vector<1x128xf32>
    %12 = vector.broadcast %11 : vector<1x128xf32> to vector<8x128xf32>
    %13 = arith.addf %10, %12 : vector<8x128xf32>
    %c0_11 = arith.constant 0 : index
    %c0_12 = arith.constant 0 : index
    %14 = vector.load %arg6[%c0_11, %c0_12] : memref<8x128xf32, #tpu.memory_space<vmem>>, vector<8x128xf32>
    tpu.vector_store %arg6[%c0_11, %c0_12], %13 {strides = array<i32>} : memref<8x128xf32, #tpu.memory_space<vmem>>, vector<8x128xf32>,
    return
  }
  func.func @transform_0(%arg0: i32) -> (i32, i32) {
    %c0_i32 = arith.constant 0 : i32
    %c0_i32_0 = arith.constant 0 : i32
    return %arg0, %c0_i32 : i32, i32
  }
  func.func @transform_1(%arg0: i32) -> (i32, i32) {
    %c0_i32 = arith.constant 0 : i32
    %c0_i32_0 = arith.constant 0 : i32
    %c0_i32_1 = arith.constant 0 : i32
    return %c0_i32, %c0_i32_0 : i32, i32
  }
  func.func @transform_2(%arg0: i32) -> (i32, i32) {
    %c0_i32 = arith.constant 0 : i32
    %c0_i32_0 = arith.constant 0 : i32
    %c0_i32_1 = arith.constant 0 : i32
    return %c0_i32, %c0_i32_0 : i32, i32
  }
  func.func @transform_3(%arg0: i32) -> (i32, i32) {
    %c0_i32 = arith.constant 0 : i32
    %c0_i32_0 = arith.constant 0 : i32
    %c0_i32_1 = arith.constant 0 : i32
    return %c0_i32, %c0_i32_0 : i32, i32
  }
  func.func @transform_4(%arg0: i32) -> (i32, i32) {
    %c0_i32 = arith.constant 0 : i32
    %c0_i32_0 = arith.constant 0 : i32
    %c0_i32_1 = arith.constant 0 : i32
    return %c0_i32, %c0_i32_0 : i32, i32
  }
  func.func @transform_5(%arg0: i32) -> (i32, i32) {
    %c0_i32 = arith.constant 0 : i32
    %c0_i32_0 = arith.constant 0 : i32
    return %arg0, %c0_i32 : i32, i32
  }
}

</mosaic_0001>

<llo_original>
// kernel: demo_encoder.1
$region0: #{demo_encoder.1}
  #allocation0 [shape = 'u32[]', space=smem, size = 0x4, offset = 0x4, fixed_abs, tag = 'smem constant byte address 0x4 - core index']
  #allocation1 [shape = 'u32[72,128]{1,0:T(1,128)}', space=vmem, size = 0x9000, scoped, tag = 'internal scratch']
  %s0 = inlined_call_operand.vmem [shape: bf16[8,128], index: 0, kind: input, shape index: {}]
  %s1 = inlined_call_operand.vmem [shape: bf16[128,512], index: 1, kind: input, shape index: {}]
  %s2 = inlined_call_operand.vmem [shape: f32[1,512], index: 2, kind: input, shape index: {}]
  %s3 = inlined_call_operand.vmem [shape: bf16[512,128], index: 3, kind: input, shape index: {}]
  %s4 = inlined_call_operand.vmem [shape: f32[1,128], index: 4, kind: input, shape index: {}]
  %s5 = inlined_call_operand.hbm [shape: f32[8,128], index: 5, kind: output, shape index: {}]
  %s6 = sld [smem:[#allocation0]]
  $region30: #{demo_encoder.1} parent=0
    _
  %s8 = ssub.s32 1, %s6
  %s9 = scalar_select 0, %s8, %s6
  $region1: #{demo_encoder.1} parent=0
    #allocation2 [shape = 'u8[4096]{0}', space=vmem, size = 0x1000, scoped, tag = 'output window, operand 0, single buffered']
    #allocation3 [shape = 's32[1]{0}', space=sflag, size = 0x4, scoped, tag = 'scoped memory for demo_encoder.1']
    %10 = vsyncpa [#allocation3], 0
    // Predicated region
    $region2: #{demo_encoder.1} parent=1 // pred_check
      _
    $region3: #{demo_encoder.1} parent=1 // pred_check_branch
      %12 = sbr.rel (0) target = $region5
    $region4: #{demo_encoder.1} parent=1 // pred_region
      _
    $region5: #{demo_encoder.1} parent=1 // pred_fallthru
      _
    // Predicated region
    $region6: #{demo_encoder.1} parent=1 // pred_check
      _
    $region7: #{demo_encoder.1} parent=1 // pred_check_branch
      %14 = sbr.rel (0) target = $region9
    $region8: #{demo_encoder.1} parent=1 // pred_region
      _
    $region9: #{demo_encoder.1} parent=1 // pred_fallthru
      _
    // Predicated region
    $region10: #{demo_encoder.1} parent=1 // pred_check
      _
    $region11: #{demo_encoder.1} parent=1 // pred_check_branch
      %16 = sbr.rel (0) target = $region13
    $region12: #{demo_encoder.1} parent=1 // pred_region
      _
    $region13: #{demo_encoder.1} parent=1 // pred_fallthru
      _
    // Predicated region
    $region14: #{demo_encoder.1} parent=1 // pred_check
      _
    $region15: #{demo_encoder.1} parent=1 // pred_check_branch
      %18 = sbr.rel (0) target = $region17
    $region16: #{demo_encoder.1} parent=1 // pred_region
      _
    $region17: #{demo_encoder.1} parent=1 // pred_fallthru
      _
    // Predicated region
    $region18: #{demo_encoder.1} parent=1 // pred_check
      _
    $region19: #{demo_encoder.1} parent=1 // pred_check_branch
      %20 = sbr.rel (0) target = $region21
    $region20: #{demo_encoder.1} parent=1 // pred_region
      _
    $region21: #{demo_encoder.1} parent=1 // pred_fallthru
      _
    %v21 = vld [vmem:[%s0] sm:$0xf]
    %v22 = vld [vmem:[%s1] sm:$0xff]
    %v23 = vld [vmem:[%s1 + $0x8] sm:$0xff]
    %v24 = vld [vmem:[%s1 + $0x10] sm:$0xff]
    %v25 = vld [vmem:[%s1 + $0x18] sm:$0xff]
    %v26 = vld [vmem:[%s1 + $0x20] sm:$0xff]
    %v27 = vld [vmem:[%s1 + $0x28] sm:$0xff]
    %v28 = vld [vmem:[%s1 + $0x30] sm:$0xff]
    %v29 = vld [vmem:[%s1 + $0x38] sm:$0xff]
    %v30 = vld [vmem:[%s1 + $0x40] sm:$0xff]
    %v31 = vld [vmem:[%s1 + $0x48] sm:$0xff]
    %v32 = vld [vmem:[%s1 + $0x50] sm:$0xff]
    %v33 = vld [vmem:[%s1 + $0x58] sm:$0xff]
    %v34 = vld [vmem:[%s1 + $0x60] sm:$0xff]
    %v35 = vld [vmem:[%s1 + $0x68] sm:$0xff]
    %v36 = vld [vmem:[%s1 + $0x70] sm:$0xff]
    %v37 = vld [vmem:[%s1 + $0x78] sm:$0xff]
    %v38 = vld [vmem:[%s1 + $0x80] sm:$0xff]
    %v39 = vld [vmem:[%s1 + $0x88] sm:$0xff]
    %v40 = vld [vmem:[%s1 + $0x90] sm:$0xff]
    %v41 = vld [vmem:[%s1 + $0x98] sm:$0xff]
    %v42 = vld [vmem:[%s1 + $0xa0] sm:$0xff]
    %v43 = vld [vmem:[%s1 + $0xa8] sm:$0xff]
    %v44 = vld [vmem:[%s1 + $0xb0] sm:$0xff]
    %v45 = vld [vmem:[%s1 + $0xb8] sm:$0xff]
    %v46 = vld [vmem:[%s1 + $0xc0] sm:$0xff]
    %v47 = vld [vmem:[%s1 + $0xc8] sm:$0xff]
    %v48 = vld [vmem:[%s1 + $0xd0] sm:$0xff]
    %v49 = vld [vmem:[%s1 + $0xd8] sm:$0xff]
    %v50 = vld [vmem:[%s1 + $0xe0] sm:$0xff]
    %v51 = vld [vmem:[%s1 + $0xe8] sm:$0xff]
    %v52 = vld [vmem:[%s1 + $0xf0] sm:$0xff]
    %v53 = vld [vmem:[%s1 + $0xf8] sm:$0xff]
    %v54 = vld [vmem:[%s2] sm:$0xf]
    %v56 = vperm.slane %v54, 0
    %v57 = vperm.slane %v54, 1
    %v58 = vperm.slane %v54, 2
    %v59 = vperm.slane %v54, 3
    %v96 = vunpack.c.l.b16 %v22
    %v97 = vunpack.c.h.b16 %v22
    %v98 = vunpack.c.l.b16 %v23
    %v99 = vunpack.c.h.b16 %v23
    %v100 = vunpack.c.l.b16 %v24
    %v101 = vunpack.c.h.b16 %v24
    %v102 = vunpack.c.l.b16 %v25
    %v103 = vunpack.c.h.b16 %v25
    %v104 = vunpack.c.l.b16 %v26
    %v105 = vunpack.c.h.b16 %v26
    %v106 = vunpack.c.l.b16 %v27
    %v107 = vunpack.c.h.b16 %v27
    %v108 = vunpack.c.l.b16 %v28
    %v109 = vunpack.c.h.b16 %v28
    %v110 = vunpack.c.l.b16 %v29
    %v111 = vunpack.c.h.b16 %v29
    %v112 = vunpack.c.l.b16 %v30
    %v113 = vunpack.c.h.b16 %v30
    %v114 = vunpack.c.l.b16 %v31
    %v115 = vunpack.c.h.b16 %v31
    %v116 = vunpack.c.l.b16 %v32
    %v117 = vunpack.c.h.b16 %v32
    %v118 = vunpack.c.l.b16 %v33
    %v119 = vunpack.c.h.b16 %v33
    %v120 = vunpack.c.l.b16 %v34
    %v121 = vunpack.c.h.b16 %v34
    %v122 = vunpack.c.l.b16 %v35
    %v123 = vunpack.c.h.b16 %v35
    %v124 = vunpack.c.l.b16 %v36
    %v125 = vunpack.c.h.b16 %v36
    %v126 = vunpack.c.l.b16 %v37
    %v127 = vunpack.c.h.b16 %v37
    %v128 = vunpack.c.l.b16 %v38
    %v129 = vunpack.c.h.b16 %v38
    %v130 = vunpack.c.l.b16 %v39
    %v131 = vunpack.c.h.b16 %v39
    %v132 = vunpack.c.l.b16 %v40
    %v133 = vunpack.c.h.b16 %v40
    %v134 = vunpack.c.l.b16 %v41
    %v135 = vunpack.c.h.b16 %v41
    %v136 = vunpack.c.l.b16 %v42
    %v137 = vunpack.c.h.b16 %v42
    %v138 = vunpack.c.l.b16 %v43
    %v139 = vunpack.c.h.b16 %v43
    %v140 = vunpack.c.l.b16 %v44
    %v141 = vunpack.c.h.b16 %v44
    %v142 = vunpack.c.l.b16 %v45
    %v143 = vunpack.c.h.b16 %v45
    %v144 = vunpack.c.l.b16 %v46
    %v145 = vunpack.c.h.b16 %v46
    %v146 = vunpack.c.l.b16 %v47
    %v147 = vunpack.c.h.b16 %v47
    %v148 = vunpack.c.l.b16 %v48
    %v149 = vunpack.c.h.b16 %v48
    %v150 = vunpack.c.l.b16 %v49
    %v151 = vunpack.c.h.b16 %v49
    %v152 = vunpack.c.l.b16 %v50
    %v153 = vunpack.c.h.b16 %v50
    %v154 = vunpack.c.l.b16 %v51
    %v155 = vunpack.c.h.b16 %v51
    %v156 = vunpack.c.l.b16 %v52
    %v157 = vunpack.c.h.b16 %v52
    %v158 = vunpack.c.l.b16 %v53
    %v159 = vunpack.c.h.b16 %v53
    %v160 = vpack.c.b16 %v100, %v96
    %v161 = vpack.c.b16 %v101, %v97
    %v162 = vpack.c.b16 %v102, %v98
    %v163 = vpack.c.b16 %v103, %v99
    %v164 = vpack.c.b16 %v108, %v104
    %v165 = vpack.c.b16 %v109, %v105
    %v166 = vpack.c.b16 %v110, %v106
    %v167 = vpack.c.b16 %v111, %v107
    %v168 = vpack.c.b16 %v116, %v112
    %v169 = vpack.c.b16 %v117, %v113
    %v170 = vpack.c.b16 %v118, %v114
    %v171 = vpack.c.b16 %v119, %v115
    %v172 = vpack.c.b16 %v124, %v120
    %v173 = vpack.c.b16 %v125, %v121
    %v174 = vpack.c.b16 %v126, %v122
    %v175 = vpack.c.b16 %v127, %v123
    %v176 = vpack.c.b16 %v132, %v128
    %v177 = vpack.c.b16 %v133, %v129
    %v178 = vpack.c.b16 %v134, %v130
    %v179 = vpack.c.b16 %v135, %v131
    %v180 = vpack.c.b16 %v140, %v136
    %v181 = vpack.c.b16 %v141, %v137
    %v182 = vpack.c.b16 %v142, %v138
    %v183 = vpack.c.b16 %v143, %v139
    %v184 = vpack.c.b16 %v148, %v144
    %v185 = vpack.c.b16 %v149, %v145
    %v186 = vpack.c.b16 %v150, %v146
    %v187 = vpack.c.b16 %v151, %v147
    %v188 = vpack.c.b16 %v156, %v152
    %v189 = vpack.c.b16 %v157, %v153
    %v190 = vpack.c.b16 %v158, %v154
    %v191 = vpack.c.b16 %v159, %v155
    %224 = vmatpush.bf16.msra.mxu0 %v188
    %225 = vmatpush.bf16.msra.mxu0 %v184
    %226 = vmatpush.bf16.msra.mxu0 %v180
    %227 = vmatpush.bf16.msra.mxu0 %v176
    %228 = vmatpush.bf16.msra.mxu0 %v172
    %229 = vmatpush.bf16.msra.mxu0 %v168
    %230 = vmatpush.bf16.msra.mxu0 %v164
    %231 = vmatpush.bf16.msra.mxu0 %v160
    %232 = vmatmul.bf16.gmra.mxu0 %v21
    %v233 = vpop.f32.mrf.mxu0
    %v234 = vadd.f32 %v56, %v233
    %v235 = vpop.f32.mrf.mxu0
    %236 = vdwg.mxu0
    %237 = vmatpush.bf16.msra.mxu0 %v189
    %238 = vmatpush.bf16.msra.mxu0 %v185
    %239 = vmatpush.bf16.msra.mxu0 %v181
    %240 = vmatpush.bf16.msra.mxu0 %v177
    %241 = vmatpush.bf16.msra.mxu0 %v173
    %242 = vmatpush.bf16.msra.mxu0 %v169
    %243 = vmatpush.bf16.msra.mxu0 %v165
    %244 = vmatpush.bf16.msra.mxu0 %v161
    %245 = vmatmul.bf16.gmra.mxu0 %v21
    %v246 = vpop.f32.mrf.mxu0
    %v247 = vadd.f32 %v57, %v246
    %v248 = vpop.f32.mrf.mxu0
    %249 = vdwg.mxu0
    %250 = vmatpush.bf16.msra.mxu0 %v190
    %251 = vmatpush.bf16.msra.mxu0 %v186
    %252 = vmatpush.bf16.msra.mxu0 %v182
    %253 = vmatpush.bf16.msra.mxu0 %v178
    %254 = vmatpush.bf16.msra.mxu0 %v174
    %255 = vmatpush.bf16.msra.mxu0 %v170
    %256 = vmatpush.bf16.msra.mxu0 %v166
    %257 = vmatpush.bf16.msra.mxu0 %v162
    %258 = vmatmul.bf16.gmra.mxu0 %v21
    %v259 = vpop.f32.mrf.mxu0
    %v260 = vadd.f32 %v58, %v259
    %v261 = vpop.f32.mrf.mxu0
    %262 = vdwg.mxu0
    %263 = vmatpush.bf16.msra.mxu0 %v191
    %264 = vmatpush.bf16.msra.mxu0 %v187
    %265 = vmatpush.bf16.msra.mxu0 %v183
    %266 = vmatpush.bf16.msra.mxu0 %v179
    %267 = vmatpush.bf16.msra.mxu0 %v175
    %268 = vmatpush.bf16.msra.mxu0 %v171
    %269 = vmatpush.bf16.msra.mxu0 %v167
    %270 = vmatpush.bf16.msra.mxu0 %v163
    %271 = vmatmul.bf16.gmra.mxu0 %v21
    %v272 = vpop.f32.mrf.mxu0
    %v273 = vadd.f32 %v59, %v272
    %v274 = vpop.f32.mrf.mxu0
    %275 = vdwg.mxu0
    %v276 = vmax.f32 %v234, 0.0
    %v277 = vmax.f32 %v247, 0.0
    %v278 = vmax.f32 %v260, 0.0
    %v279 = vmax.f32 %v273, 0.0
    %v280 = vpack.c.bf16 %v276, %v276
    %v281 = vpack.c.bf16 %v277, %v277
    %v282 = vpack.c.bf16 %v278, %v278
    %v283 = vpack.c.bf16 %v279, %v279
    %v284 = vld [vmem:[%s3] sm:$0xf]
    %v285 = vld [vmem:[%s3 + $0x4] sm:$0xf]
    %v286 = vld [vmem:[%s3 + $0x8] sm:$0xf]
    %v287 = vld [vmem:[%s3 + $0xc] sm:$0xf]
    %v288 = vld [vmem:[%s3 + $0x10] sm:$0xf]
    %v289 = vld [vmem:[%s3 + $0x14] sm:$0xf]
    %v290 = vld [vmem:[%s3 + $0x18] sm:$0xf]
    %v291 = vld [vmem:[%s3 + $0x1c] sm:$0xf]
    %v292 = vld [vmem:[%s3 + $0x20] sm:$0xf]
    %v293 = vld [vmem:[%s3 + $0x24] sm:$0xf]
    %v294 = vld [vmem:[%s3 + $0x28] sm:$0xf]
    %v295 = vld [vmem:[%s3 + $0x2c] sm:$0xf]
    %v296 = vld [vmem:[%s3 + $0x30] sm:$0xf]
    %v297 = vld [vmem:[%s3 + $0x34] sm:$0xf]
    %v298 = vld [vmem:[%s3 + $0x38] sm:$0xf]
    %v299 = vld [vmem:[%s3 + $0x3c] sm:$0xf]
    %v300 = vld [vmem:[%s3 + $0x40] sm:$0xf]
    %v301 = vld [vmem:[%s3 + $0x44] sm:$0xf]
    %v302 = vld [vmem:[%s3 + $0x48] sm:$0xf]
    %v303 = vld [vmem:[%s3 + $0x4c] sm:$0xf]
    %v304 = vld [vmem:[%s3 + $0x50] sm:$0xf]
    %v305 = vld [vmem:[%s3 + $0x54] sm:$0xf]
    %v306 = vld [vmem:[%s3 + $0x58] sm:$0xf]
    %v307 = vld [vmem:[%s3 + $0x5c] sm:$0xf]
    %v308 = vld [vmem:[%s3 + $0x60] sm:$0xf]
    %v309 = vld [vmem:[%s3 + $0x64] sm:$0xf]
    %v310 = vld [vmem:[%s3 + $0x68] sm:$0xf]
    %v311 = vld [vmem:[%s3 + $0x6c] sm:$0xf]
    %v312 = vld [vmem:[%s3 + $0x70] sm:$0xf]
    %v313 = vld [vmem:[%s3 + $0x74] sm:$0xf]
    %v314 = vld [vmem:[%s3 + $0x78] sm:$0xf]
    %v315 = vld [vmem:[%s3 + $0x7c] sm:$0xf]
    %v316 = vld [vmem:[%s3 + $0x80] sm:$0xf]
    %v317 = vld [vmem:[%s3 + $0x84] sm:$0xf]
    %v318 = vld [vmem:[%s3 + $0x88] sm:$0xf]
    %v319 = vld [vmem:[%s3 + $0x8c] sm:$0xf]
    %v320 = vld [vmem:[%s3 + $0x90] sm:$0xf]
    %v321 = vld [vmem:[%s3 + $0x94] sm:$0xf]
    %v322 = vld [vmem:[%s3 + $0x98] sm:$0xf]
    %v323 = vld [vmem:[%s3 + $0x9c] sm:$0xf]
    %v324 = vld [vmem:[%s3 + $0xa0] sm:$0xf]
    %v325 = vld [vmem:[%s3 + $0xa4] sm:$0xf]
    %v326 = vld [vmem:[%s3 + $0xa8] sm:$0xf]
    %v327 = vld [vmem:[%s3 + $0xac] sm:$0xf]
    %v328 = vld [vmem:[%s3 + $0xb0] sm:$0xf]
    %v329 = vld [vmem:[%s3 + $0xb4] sm:$0xf]
    %v330 = vld [vmem:[%s3 + $0xb8] sm:$0xf]
    %v331 = vld [vmem:[%s3 + $0xbc] sm:$0xf]
    %v332 = vld [vmem:[%s3 + $0xc0] sm:$0xf]
    %v333 = vld [vmem:[%s3 + $0xc4] sm:$0xf]
    %v334 = vld [vmem:[%s3 + $0xc8] sm:$0xf]
    %v335 = vld [vmem:[%s3 + $0xcc] sm:$0xf]
    %v336 = vld [vmem:[%s3 + $0xd0] sm:$0xf]
    %v337 = vld [vmem:[%s3 + $0xd4] sm:$0xf]
    %v338 = vld [vmem:[%s3 + $0xd8] sm:$0xf]
    %v339 = vld [vmem:[%s3 + $0xdc] sm:$0xf]
    %v340 = vld [vmem:[%s3 + $0xe0] sm:$0xf]
    %v341 = vld [vmem:[%s3 + $0xe4] sm:$0xf]
    %v342 = vld [vmem:[%s3 + $0xe8] sm:$0xf]
    %v343 = vld [vmem:[%s3 + $0xec] sm:$0xf]
    %v344 = vld [vmem:[%s3 + $0xf0] sm:$0xf]
    %v345 = vld [vmem:[%s3 + $0xf4] sm:$0xf]
    %v346 = vld [vmem:[%s3 + $0xf8] sm:$0xf]
    %v347 = vld [vmem:[%s3 + $0xfc] sm:$0xf]
    %v348 = vld [vmem:[%s4] sm:$0x1]
    %v350 = vperm.slane %v348, 0
    %v416 = vunpack.c.l.b16 %v284
    %v417 = vunpack.c.l.b16 %v285
    %v418 = vunpack.c.l.b16 %v286
    %v419 = vunpack.c.l.b16 %v287
    %v420 = vunpack.c.l.b16 %v288
    %v421 = vunpack.c.l.b16 %v289
    %v422 = vunpack.c.l.b16 %v290
    %v423 = vunpack.c.l.b16 %v291
    %v424 = vunpack.c.l.b16 %v292
    %v425 = vunpack.c.l.b16 %v293
    %v426 = vunpack.c.l.b16 %v294
    %v427 = vunpack.c.l.b16 %v295
    %v428 = vunpack.c.l.b16 %v296
    %v429 = vunpack.c.l.b16 %v297
    %v430 = vunpack.c.l.b16 %v298
    %v431 = vunpack.c.l.b16 %v299
    %v432 = vunpack.c.l.b16 %v300
    %v433 = vunpack.c.l.b16 %v301
    %v434 = vunpack.c.l.b16 %v302
    %v435 = vunpack.c.l.b16 %v303
    %v436 = vunpack.c.l.b16 %v304
    %v437 = vunpack.c.l.b16 %v305
    %v438 = vunpack.c.l.b16 %v306
    %v439 = vunpack.c.l.b16 %v307
    %v440 = vunpack.c.l.b16 %v308
    %v441 = vunpack.c.l.b16 %v309
    %v442 = vunpack.c.l.b16 %v310
    %v443 = vunpack.c.l.b16 %v311
    %v444 = vunpack.c.l.b16 %v312
    %v445 = vunpack.c.l.b16 %v313
    %v446 = vunpack.c.l.b16 %v314
    %v447 = vunpack.c.l.b16 %v315
    %v448 = vunpack.c.l.b16 %v316
    %v449 = vunpack.c.l.b16 %v317
    %v450 = vunpack.c.l.b16 %v318
    %v451 = vunpack.c.l.b16 %v319
    %v452 = vunpack.c.l.b16 %v320
    %v453 = vunpack.c.l.b16 %v321
    %v454 = vunpack.c.l.b16 %v322
    %v455 = vunpack.c.l.b16 %v323
    %v456 = vunpack.c.l.b16 %v324
    %v457 = vunpack.c.l.b16 %v325
    %v458 = vunpack.c.l.b16 %v326
    %v459 = vunpack.c.l.b16 %v327
    %v460 = vunpack.c.l.b16 %v328
    %v461 = vunpack.c.l.b16 %v329
    %v462 = vunpack.c.l.b16 %v330
    %v463 = vunpack.c.l.b16 %v331
    %v464 = vunpack.c.l.b16 %v332
    %v465 = vunpack.c.l.b16 %v333
    %v466 = vunpack.c.l.b16 %v334
    %v467 = vunpack.c.l.b16 %v335
    %v468 = vunpack.c.l.b16 %v336
    %v469 = vunpack.c.l.b16 %v337
    %v470 = vunpack.c.l.b16 %v338
    %v471 = vunpack.c.l.b16 %v339
    %v472 = vunpack.c.l.b16 %v340
    %v473 = vunpack.c.l.b16 %v341
    %v474 = vunpack.c.l.b16 %v342
    %v475 = vunpack.c.l.b16 %v343
    %v476 = vunpack.c.l.b16 %v344
    %v477 = vunpack.c.l.b16 %v345
    %v478 = vunpack.c.l.b16 %v346
    %v479 = vunpack.c.l.b16 %v347
    %v480 = vpack.c.b16 %v417, %v416
    %v481 = vpack.c.b16 %v419, %v418
    %v482 = vpack.c.b16 %v421, %v420
    %v483 = vpack.c.b16 %v423, %v422
    %v484 = vpack.c.b16 %v425, %v424
    %v485 = vpack.c.b16 %v427, %v426
    %v486 = vpack.c.b16 %v429, %v428
    %v487 = vpack.c.b16 %v431, %v430
    %v488 = vpack.c.b16 %v433, %v432
    %v489 = vpack.c.b16 %v435, %v434
    %v490 = vpack.c.b16 %v437, %v436
    %v491 = vpack.c.b16 %v439, %v438
    %v492 = vpack.c.b16 %v441, %v440
    %v493 = vpack.c.b16 %v443, %v442
    %v494 = vpack.c.b16 %v445, %v444
    %v495 = vpack.c.b16 %v447, %v446
    %v496 = vpack.c.b16 %v449, %v448
    %v497 = vpack.c.b16 %v451, %v450
    %v498 = vpack.c.b16 %v453, %v452
    %v499 = vpack.c.b16 %v455, %v454
    %v500 = vpack.c.b16 %v457, %v456
    %v501 = vpack.c.b16 %v459, %v458
    %v502 = vpack.c.b16 %v461, %v460
    %v503 = vpack.c.b16 %v463, %v462
    %v504 = vpack.c.b16 %v465, %v464
    %v505 = vpack.c.b16 %v467, %v466
    %v506 = vpack.c.b16 %v469, %v468
    %v507 = vpack.c.b16 %v471, %v470
    %v508 = vpack.c.b16 %v473, %v472
    %v509 = vpack.c.b16 %v475, %v474
    %v510 = vpack.c.b16 %v477, %v476
    %v511 = vpack.c.b16 %v479, %v478
    %544 = vmatpush.bf16.msra.mxu0 %v487
    %545 = vmatpush.bf16.msra.mxu0 %v486
    %546 = vmatpush.bf16.msra.mxu0 %v485
    %547 = vmatpush.bf16.msra.mxu0 %v484
    %548 = vmatpush.bf16.msra.mxu0 %v483
    %549 = vmatpush.bf16.msra.mxu0 %v482
    %550 = vmatpush.bf16.msra.mxu0 %v481
    %551 = vmatpush.bf16.msra.mxu0 %v480
    %552 = vmatmul.bf16.gmra.mxu0 %v280
    %v553 = vpop.f32.mrf.mxu0
    %v554 = vadd.f32 %v350, %v553
    %v555 = vpop.f32.mrf.mxu0
    %556 = vdwg.mxu0
    %557 = vmatpush.bf16.msra.mxu0 %v495
    %558 = vmatpush.bf16.msra.mxu0 %v494
    %559 = vmatpush.bf16.msra.mxu0 %v493
    %560 = vmatpush.bf16.msra.mxu0 %v492
    %561 = vmatpush.bf16.msra.mxu0 %v491
    %562 = vmatpush.bf16.msra.mxu0 %v490
    %563 = vmatpush.bf16.msra.mxu0 %v489
    %564 = vmatpush.bf16.msra.mxu0 %v488
    %565 = vmatmul.bf16.gmra.mxu0 %v281
    %v566 = vpop.f32.mrf.mxu0
    %v567 = vadd.f32 %v554, %v566
    %v568 = vpop.f32.mrf.mxu0
    %569 = vdwg.mxu0
    %570 = vmatpush.bf16.msra.mxu0 %v503
    %571 = vmatpush.bf16.msra.mxu0 %v502
    %572 = vmatpush.bf16.msra.mxu0 %v501
    %573 = vmatpush.bf16.msra.mxu0 %v500
    %574 = vmatpush.bf16.msra.mxu0 %v499
    %575 = vmatpush.bf16.msra.mxu0 %v498
    %576 = vmatpush.bf16.msra.mxu0 %v497
    %577 = vmatpush.bf16.msra.mxu0 %v496
    %578 = vmatmul.bf16.gmra.mxu0 %v282
    %v579 = vpop.f32.mrf.mxu0
    %v580 = vadd.f32 %v567, %v579
    %v581 = vpop.f32.mrf.mxu0
    %582 = vdwg.mxu0
    %583 = vmatpush.bf16.msra.mxu0 %v511
    %584 = vmatpush.bf16.msra.mxu0 %v510
    %585 = vmatpush.bf16.msra.mxu0 %v509
    %586 = vmatpush.bf16.msra.mxu0 %v508
    %587 = vmatpush.bf16.msra.mxu0 %v507
    %588 = vmatpush.bf16.msra.mxu0 %v506
    %589 = vmatpush.bf16.msra.mxu0 %v505
    %590 = vmatpush.bf16.msra.mxu0 %v504
    %591 = vmatmul.bf16.gmra.mxu0 %v283
    %v592 = vpop.f32.mrf.mxu0
    %v593 = vadd.f32 %v580, %v592
    %v594 = vpop.f32.mrf.mxu0
    %595 = vdwg.mxu0
    %596 = vst [vmem:[#allocation2] sm:$0xff] %v593
    // Predicated region
    $region22: #{demo_encoder.1} parent=1 // pred_check
      _
    $region23: #{demo_encoder.1} parent=1 // pred_check_branch
      %598 = sbr.rel (0) target = $region25
    $region24: #{demo_encoder.1} parent=1 // pred_region
      %600 = vsyncadd [#allocation3], 0
      %s602 = sshll.u32 [#allocation2], 4
      %s603 = int_to_ptr.vmem [resolvable:$true] %s602
      %s604 = sshll.u32 %s5, 4
      %s605 = int_to_ptr.hbm [resolvable:$true] %s604
      %607 = dma.vmem_to_hbm [thread:$0]  %s603, 128, %s605, [#allocation3]
    $region25: #{demo_encoder.1} parent=1 // pred_fallthru
      _
    // Predicated region
    $region26: #{demo_encoder.1} parent=1 // pred_check
      _
    $region27: #{demo_encoder.1} parent=1 // pred_check_branch
      %609 = sbr.rel (0) target = $region29
    $region28: #{demo_encoder.1} parent=1 // pred_region
      %611 = dma.done [#allocation3], 128
    $region29: #{demo_encoder.1} parent=1 // pred_fallthru
      _
    %612 = vsyncpa [#allocation3], 1

</llo_original>
